<compile_context>
chip_gen: v7x
topology: tpu7x:2x2x1
jax: 0.10.0
libtpu: 0.0.40
codegen_flags: <defaults>
</compile_context>

<pallas_src>
import functools
import math

import jax
import jax.numpy as jnp
from jax.experimental import pallas as pl
from jax.experimental.pallas import tpu as pltpu


def _round_up(v, m):
    return ((v + m - 1) // m) * m


def _make_mlp_kernel(n_layers):
    """Kernel over one batch tile: all layers fused, weights VMEM-resident."""

    def kernel(*refs):
        # refs = (x_ref, W0, b0, W1, b1, ..., W_{L-1}, b_{L-1}, o_ref)
        x_ref = refs[0]
        o_ref = refs[-1]
        a = x_ref[...]
        for i in range(n_layers):
            w = refs[1 + 2 * i][...]
            b = refs[2 + 2 * i][...]          # (1, N) broadcast-add, done once per tile
            z = jnp.dot(a, w, preferred_element_type=jnp.float32) + b
            a = jnp.maximum(z, 0.0) if i < n_layers - 1 else z
        o_ref[...] = a.astype(o_ref.dtype)

    return kernel


@functools.partial(jax.jit, static_argnames=("block_b",))
def dnn_forward(x, params, *, block_b=512):
    """params = {'W': [W0, ..., W_{L-1}], 'b': [b0, ..., b_{L-1}]}.

    Semantics match Dnn._forward_propagation: relu on all but the last layer.
    """
    W = list(params["W"])
    b = list(params["b"])
    n_layers = len(W)
    B, x_size = x.shape
    y_size = W[-1].shape[1]

    # --- lane-dense output: pad final out dim to a multiple of 128 ------------
    y_pad = _round_up(max(y_size, 128), 128)
    if y_pad != y_size:
        W[-1] = jnp.pad(W[-1], ((0, 0), (0, y_pad - y_size)))
        b[-1] = jnp.pad(b[-1], ((0, 0), (0, y_pad - y_size)))

    # --- batch tiling: tile rows, pad B up to a multiple of the tile ----------
    bb = min(block_b, _round_up(B, 8))          # tile rows (multiple of 8 sublanes)
    B_pad = _round_up(B, bb)
    x_p = jnp.pad(x, ((0, B_pad - B), (0, 0))) if B_pad != B else x
    grid = (B_pad // bb,)

    # Per-tile VMEM footprint (f32, double-buffered activations):
    #   2*(bb*x_size + bb*y_pad)*4B + weights  ->  well under default scoped
    #   VMEM on v5e (16 MiB) / v6e (32 MiB) / v7x (32 of 64 MiB) for bb<=1024.
    in_specs = [pl.BlockSpec((bb, x_size), lambda i: (i, 0))]
    operands = [x_p]
    for Wi, bi in zip(W, b):
        in_specs.append(pl.BlockSpec(Wi.shape, lambda i: (0, 0)))  # weights stay resident
        in_specs.append(pl.BlockSpec(bi.shape, lambda i: (0, 0)))
        operands += [Wi, bi]
    out_spec = pl.BlockSpec((bb, y_pad), lambda i: (i, 0))

    flops = 2 * B_pad * sum(Wi.shape[0] * Wi.shape[1] for Wi in W)
    bytes_accessed = 4 * (
        x_p.size
        + sum(Wi.size + bi.size for Wi, bi in zip(W, b))
        + B_pad * y_pad
    )

    out_padded = pl.pallas_call(
        _make_mlp_kernel(n_layers),
        out_shape=jax.ShapeDtypeStruct((B_pad, y_pad), jnp.float32),
        grid=grid,
        in_specs=in_specs,
        out_specs=out_spec,
        compiler_params=pltpu.CompilerParams(
            dimension_semantics=("parallel",),      # 2x on v7x (2 TCs), no-op on v5e/v6e
            vmem_limit_bytes=64 * 1024 * 1024,
        ),
        cost_estimate=pl.CostEstimate(
            flops=flops, transcendentals=0, bytes_accessed=bytes_accessed
        ),
    )(*operands)

    return out_padded[:B, :y_size]


# --------------------------- init + pure-JAX reference -------------------------


def _xavier_uniform(key, shape, dtype=jnp.float32):
    fan_in, fan_out = shape
    limit = math.sqrt(6.0 / (fan_in + fan_out))
    return jax.random.uniform(key, shape, dtype=dtype, minval=-limit, maxval=limit)


def init_params(key, x_size, h_size, y_size):
    """Deterministic re-implementation of Dnn._initialize_parameters."""
    dims = [x_size] + list(h_size) + [y_size]
    W, b = [], []
    for i in range(len(dims) - 1):
        key, sub = jax.random.split(key)
        W.append(_xavier_uniform(sub, (dims[i], dims[i + 1])))
        b.append(jnp.zeros((1, dims[i + 1]), jnp.float32))
    return {"W": W, "b": b}


def _reference_forward(x, params):
    """Pure-JAX reference mirroring Dnn._forward_propagation."""
    W, b = params["W"], params["b"]
    a = jnp.maximum(x @ W[0] + b[0], 0.0)
    for i in range(1, len(W) - 1):
        a = jnp.maximum(a @ W[i] + b[i], 0.0)
    return a @ W[-1] + b[-1]


if __name__ == "__main__":
    key = jax.random.PRNGKey(0)

    # small shapes consistent with the module: x_size=16, h_size=[32, 32], y_size=8
    x_size, h_size, y_size = 16, [32, 32], 8
    batch = 10  # intentionally not a multiple of 8 to exercise the padding path

    key, kx, kp = jax.random.split(key, 3)
    x = jax.random.normal(kx, (batch, x_size), jnp.float32)
    params = init_params(kp, x_size, h_size, y_size)

    out = dnn_forward(x, params, block_b=512)
    jax.block_until_ready(out)

    ref = _reference_forward(x, params)
    assert out.shape == (batch, y_size)
    assert jnp.allclose(out, ref, atol=1e-5, rtol=1e-5)

    print("KERNEL_OK")
</pallas_src>

<mosaic_0001>
module attributes {stable_mosaic.version = 11 : i64} {
  func.func @kernel(%arg0: i32, %arg1: memref<16x16xf32, #tpu.memory_space<vmem>>, %arg2: memref<16x32xf32, #tpu.memory_space<vmem>>, %arg3: memref<1x32xf32, #tpu.memory_space<vmem>>, %arg4: memref<32x32xf32, #tpu.memory_space<vmem>>, %arg5: memref<1x32xf32, #tpu.memory_space<vmem>>, %arg6: memref<32x128xf32, #tpu.memory_space<vmem>>, %arg7: memref<1x128xf32, #tpu.memory_space<vmem>>, %arg8: memref<16x128xf32, #tpu.memory_space<vmem>>) attributes {dimension_semantics = [#tpu.dimension_semantics<parallel>], iteration_bounds = array<i64: 1>, scalar_prefetch = 0 : i64, scratch_operands = 0 : i64, tpu.core_type = #tpu.core_type<tc>, window_params = [{transform_indices = @transform_0, window_bounds = array<i64: 16, 16>}, {pipeline_mode = #tpu.pipeline_mode<synchronous>, transform_indices = @transform_1, window_bounds = array<i64: 16, 32>}, {pipeline_mode = #tpu.pipeline_mode<synchronous>, transform_indices = @transform_2, window_bounds = array<i64: 1, 32>}, {pipeline_mode = #tpu.pipeline_mode<synchronous>, transform_indices = @transform_3, window_bounds = array<i64: 32, 32>}, {pipeline_mode = #tpu.pipeline_mode<synchronous>, transform_indices = @transform_4, window_bounds = array<i64: 1, 32>}, {pipeline_mode = #tpu.pipeline_mode<synchronous>, transform_indices = @transform_5, window_bounds = array<i64: 32, 128>}, {pipeline_mode = #tpu.pipeline_mode<synchronous>, transform_indices = @transform_6, window_bounds = array<i64: 1, 128>}, {transform_indices = @transform_7, window_bounds = array<i64: 16, 128>}]} {
    %c0 = arith.constant 0 : index
    %c0_0 = arith.constant 0 : index
    %0 = vector.load %arg1[%c0, %c0_0] : memref<16x16xf32, #tpu.memory_space<vmem>>, vector<16x16xf32>
    %c0_1 = arith.constant 0 : index
    %c0_2 = arith.constant 0 : index
    %1 = vector.load %arg2[%c0_1, %c0_2] : memref<16x32xf32, #tpu.memory_space<vmem>>, vector<16x32xf32>
    %c0_3 = arith.constant 0 : index
    %c0_4 = arith.constant 0 : index
    %2 = vector.load %arg3[%c0_3, %c0_4] : memref<1x32xf32, #tpu.memory_space<vmem>>, vector<1x32xf32>
    %cst = arith.constant dense<0.000000e+00> : vector<16x32xf32>
    %3 = tpu.matmul %0, %1, %cst {dimension_numbers = #tpu.dot_dimension_numbers<[1], [0], [0], [1], [0, 0, 1, 1], [], []>} : vector<16x16xf32>, vector<16x32xf32>, vector<16x32xf32> -> vector<16x32xf32>
    %4 = vector.broadcast %2 : vector<1x32xf32> to vector<16x32xf32>
    %5 = arith.addf %3, %4 : vector<16x32xf32>
    %cst_5 = arith.constant 0.000000e+00 : f32
    %6 = vector.broadcast %cst_5 : f32 to vector<16x32xf32>
    %7 = arith.maximumf %5, %6 : vector<16x32xf32>
    %c0_6 = arith.constant 0 : index
    %c0_7 = arith.constant 0 : index
    %8 = vector.load %arg4[%c0_6, %c0_7] : memref<32x32xf32, #tpu.memory_space<vmem>>, vector<32x32xf32>
    %c0_8 = arith.constant 0 : index
    %c0_9 = arith.constant 0 : index
    %9 = vector.load %arg5[%c0_8, %c0_9] : memref<1x32xf32, #tpu.memory_space<vmem>>, vector<1x32xf32>
    %cst_10 = arith.constant dense<0.000000e+00> : vector<16x32xf32>
    %10 = tpu.matmul %7, %8, %cst_10 {dimension_numbers = #tpu.dot_dimension_numbers<[1], [0], [0], [1], [0, 0, 1, 1], [], []>} : vector<16x32xf32>, vector<32x32xf32>, vector<16x32xf32> -> vector<16x32xf32>
    %11 = vector.broadcast %9 : vector<1x32xf32> to vector<16x32xf32>
    %12 = arith.addf %10, %11 : vector<16x32xf32>
    %cst_11 = arith.constant 0.000000e+00 : f32
    %13 = vector.broadcast %cst_11 : f32 to vector<16x32xf32>
    %14 = arith.maximumf %12, %13 : vector<16x32xf32>
    %c0_12 = arith.constant 0 : index
    %c0_13 = arith.constant 0 : index
    %15 = vector.load %arg6[%c0_12, %c0_13] : memref<32x128xf32, #tpu.memory_space<vmem>>, vector<32x128xf32>
    %c0_14 = arith.constant 0 : index
    %c0_15 = arith.constant 0 : index
    %16 = vector.load %arg7[%c0_14, %c0_15] : memref<1x128xf32, #tpu.memory_space<vmem>>, vector<1x128xf32>
    %cst_16 = arith.constant dense<0.000000e+00> : vector<16x128xf32>
    %17 = tpu.matmul %14, %15, %cst_16 {dimension_numbers = #tpu.dot_dimension_numbers<[1], [0], [0], [1], [0, 0, 1, 1], [], []>} : vector<16x32xf32>, vector<32x128xf32>, vector<16x128xf32> -> vector<16x128xf32>
    %18 = vector.broadcast %16 : vector<1x128xf32> to vector<16x128xf32>
    %19 = arith.addf %17, %18 : vector<16x128xf32>
    %c0_17 = arith.constant 0 : index
    %c0_18 = arith.constant 0 : index
    %20 = vector.load %arg8[%c0_17, %c0_18] : memref<16x128xf32, #tpu.memory_space<vmem>>, vector<16x128xf32>
    tpu.vector_store %arg8[%c0_17, %c0_18], %19 {strides = array<i32>} : memref<16x128xf32, #tpu.memory_space<vmem>>, vector<16x128xf32>,
    return
  }
  func.func @transform_0(%arg0: i32) -> (i32, i32) {
    %c0_i32 = arith.constant 0 : i32
    %c0_i32_0 = arith.constant 0 : i32
    return %arg0, %c0_i32 : i32, i32
  }
  func.func @transform_1(%arg0: i32) -> (i32, i32) {
    %c0_i32 = arith.constant 0 : i32
    %c0_i32_0 = arith.constant 0 : i32
    %c0_i32_1 = arith.constant 0 : i32
    return %c0_i32, %c0_i32_0 : i32, i32
  }
  func.func @transform_2(%arg0: i32) -> (i32, i32) {
    %c0_i32 = arith.constant 0 : i32
    %c0_i32_0 = arith.constant 0 : i32
    %c0_i32_1 = arith.constant 0 : i32
    return %c0_i32, %c0_i32_0 : i32, i32
  }
  func.func @transform_3(%arg0: i32) -> (i32, i32) {
    %c0_i32 = arith.constant 0 : i32
    %c0_i32_0 = arith.constant 0 : i32
    %c0_i32_1 = arith.constant 0 : i32
    return %c0_i32, %c0_i32_0 : i32, i32
  }
  func.func @transform_4(%arg0: i32) -> (i32, i32) {
    %c0_i32 = arith.constant 0 : i32
    %c0_i32_0 = arith.constant 0 : i32
    %c0_i32_1 = arith.constant 0 : i32
    return %c0_i32, %c0_i32_0 : i32, i32
  }
  func.func @transform_5(%arg0: i32) -> (i32, i32) {
    %c0_i32 = arith.constant 0 : i32
    %c0_i32_0 = arith.constant 0 : i32
    %c0_i32_1 = arith.constant 0 : i32
    return %c0_i32, %c0_i32_0 : i32, i32
  }
  func.func @transform_6(%arg0: i32) -> (i32, i32) {
    %c0_i32 = arith.constant 0 : i32
    %c0_i32_0 = arith.constant 0 : i32
    %c0_i32_1 = arith.constant 0 : i32
    return %c0_i32, %c0_i32_0 : i32, i32
  }
  func.func @transform_7(%arg0: i32) -> (i32, i32) {
    %c0_i32 = arith.constant 0 : i32
    %c0_i32_0 = arith.constant 0 : i32
    return %arg0, %c0_i32 : i32, i32
  }
}

</mosaic_0001>

<llo_original>
// kernel: dnn_forward.1
$region0: #{dnn_forward.1}
  #allocation0 [shape = 'u32[]', space=smem, size = 0x4, offset = 0x4, fixed_abs, tag = 'smem constant byte address 0x4 - core index']
  #allocation1 [shape = 'u32[144,128]{1,0:T(1,128)}', space=vmem, size = 0x12000, scoped, tag = 'internal scratch']
  %s0 = inlined_call_operand.hbm [shape: f32[16,16], index: 0, kind: input, shape index: {}]
  %s1 = inlined_call_operand.hbm [shape: f32[16,32], index: 1, kind: input, shape index: {}]
  %s2 = inlined_call_operand.hbm [shape: f32[1,32], index: 2, kind: input, shape index: {}]
  %s3 = inlined_call_operand.hbm [shape: f32[32,32], index: 3, kind: input, shape index: {}]
  %s4 = inlined_call_operand.hbm [shape: f32[1,32], index: 4, kind: input, shape index: {}]
  %s5 = inlined_call_operand.hbm [shape: f32[32,128], index: 5, kind: input, shape index: {}]
  %s6 = inlined_call_operand.hbm [shape: f32[1,128], index: 6, kind: input, shape index: {}]
  %s7 = inlined_call_operand.hbm [shape: f32[16,128], index: 7, kind: output, shape index: {}]
  %s8 = sld [smem:[#allocation0]]
  $region66: #{dnn_forward.1} parent=0
    _
  %s10 = ssub.s32 1, %s8
  %s11 = scalar_select 0, %s10, %s8
  $region1: #{dnn_forward.1} parent=0
    #allocation2 [shape = 'u8[8192]{0}', space=vmem, size = 0x2000, scoped, tag = 'input window, operand 0, single buffered']
    #allocation3 [shape = 's32[1]{0}', space=sflag, size = 0x4, scoped, tag = 'scoped memory for dnn_forward.1']
    #allocation4 [shape = 's32[1]{0}', space=sflag, size = 0x4, scoped, tag = 'scoped memory for dnn_forward.1']
    #allocation5 [shape = 'u8[8192]{0}', space=vmem, size = 0x2000, scoped, tag = 'input window, operand 1, single buffered']
    #allocation6 [shape = 's32[1]{0}', space=sflag, size = 0x4, scoped, tag = 'scoped memory for dnn_forward.1']
    #allocation7 [shape = 'u8[512]{0}', space=vmem, size = 0x400, scoped, tag = 'input window, operand 2, single buffered']
    #allocation8 [shape = 'u8[16384]{0}', space=vmem, size = 0x4000, scoped, tag = 'input window, operand 3, single buffered']
    #allocation9 [shape = 's32[1]{0}', space=sflag, size = 0x4, scoped, tag = 'scoped memory for dnn_forward.1']
    #allocation10 [shape = 'u8[512]{0}', space=vmem, size = 0x400, scoped, tag = 'input window, operand 4, single buffered']
    #allocation11 [shape = 'u8[16384]{0}', space=vmem, size = 0x4000, scoped, tag = 'input window, operand 5, single buffered']
    #allocation12 [shape = 's32[1]{0}', space=sflag, size = 0x4, scoped, tag = 'scoped memory for dnn_forward.1']
    #allocation13 [shape = 'u8[512]{0}', space=vmem, size = 0x400, scoped, tag = 'input window, operand 6, single buffered']
    #allocation14 [shape = 'u8[8192]{0}', space=vmem, size = 0x2000, scoped, tag = 'output window, operand 0, single buffered']
    %12 = vsyncpa [#allocation3], 0
    %13 = vsyncpa [#allocation6], 0
    %14 = vsyncpa [#allocation9], 0
    %15 = vsyncpa [#allocation12], 0
    %16 = vsyncpa [#allocation4], 0
    // Predicated region
    $region2: #{dnn_forward.1} parent=1 // pred_check
      _
    $region3: #{dnn_forward.1} parent=1 // pred_check_branch
      %18 = sbr.rel (0) target = $region5
    $region4: #{dnn_forward.1} parent=1 // pred_region
      %s20 = ssub.s32 256, 256
      %21 = vsyncadd [#allocation3], %s20
      %s22 = sshll.u32 [#allocation2], 4
      %s23 = int_to_ptr.vmem [resolvable:$true] %s22
      %28 = dma.hbm_to_vmem [thread:$0]  %s0, 256, %s23, [#allocation3], 128, 128, 8
    $region5: #{dnn_forward.1} parent=1 // pred_fallthru
      _
    // Predicated region
    $region6: #{dnn_forward.1} parent=1 // pred_check
      _
    $region7: #{dnn_forward.1} parent=1 // pred_check_branch
      %30 = sbr.rel (0) target = $region9
    $region8: #{dnn_forward.1} parent=1 // pred_region
      %s32 = ssub.s32 256, 256
      %33 = vsyncadd [#allocation6], %s32
      %s34 = sshll.u32 [#allocation5], 4
      %s35 = int_to_ptr.vmem [resolvable:$true] %s34
      %40 = dma.hbm_to_vmem [thread:$0]  %s1, 256, %s35, [#allocation6], 128, 128, 8
    $region9: #{dnn_forward.1} parent=1 // pred_fallthru
      _
    // Predicated region
    $region10: #{dnn_forward.1} parent=1 // pred_check
      _
    $region11: #{dnn_forward.1} parent=1 // pred_check_branch
      %42 = sbr.rel (0) target = $region13
    $region12: #{dnn_forward.1} parent=1 // pred_region
      %s44 = ssub.s32 16, 16
      %45 = vsyncadd [#allocation6], %s44
      %s47 = sshll.u32 [#allocation7], 4
      %s48 = int_to_ptr.vmem [resolvable:$true] %s47
      %50 = dma.hbm_to_vmem [thread:$0]  %s2, 16, %s48, [#allocation6]
    $region13: #{dnn_forward.1} parent=1 // pred_fallthru
      _
    // Predicated region
    $region14: #{dnn_forward.1} parent=1 // pred_check
      _
    $region15: #{dnn_forward.1} parent=1 // pred_check_branch
      %52 = sbr.rel (0) target = $region17
    $region16: #{dnn_forward.1} parent=1 // pred_region
      %s54 = ssub.s32 512, 512
      %55 = vsyncadd [#allocation9], %s54
      %s56 = sshll.u32 [#allocation8], 4
      %s57 = int_to_ptr.vmem [resolvable:$true] %s56
      %62 = dma.hbm_to_vmem [thread:$0]  %s3, 512, %s57, [#allocation9], 128, 128, 8
    $region17: #{dnn_forward.1} parent=1 // pred_fallthru
      _
    // Predicated region
    $region18: #{dnn_forward.1} parent=1 // pred_check
      _
    $region19: #{dnn_forward.1} parent=1 // pred_check_branch
      %64 = sbr.rel (0) target = $region21
    $region20: #{dnn_forward.1} parent=1 // pred_region
      %s66 = ssub.s32 16, 16
      %67 = vsyncadd [#allocation9], %s66
      %s69 = sshll.u32 [#allocation10], 4
      %s70 = int_to_ptr.vmem [resolvable:$true] %s69
      %72 = dma.hbm_to_vmem [thread:$0]  %s4, 16, %s70, [#allocation9]
    $region21: #{dnn_forward.1} parent=1 // pred_fallthru
      _
    // Predicated region
    $region22: #{dnn_forward.1} parent=1 // pred_check
      _
    $region23: #{dnn_forward.1} parent=1 // pred_check_branch
      %74 = sbr.rel (0) target = $region25
    $region24: #{dnn_forward.1} parent=1 // pred_region
      %s76 = ssub.s32 512, 512
      %77 = vsyncadd [#allocation12], %s76
      %s78 = sshll.u32 [#allocation11], 4
      %s79 = int_to_ptr.vmem [resolvable:$true] %s78
      %84 = dma.hbm_to_vmem [thread:$0]  %s5, 512, %s79, [#allocation12], 128, 128, 8
    $region25: #{dnn_forward.1} parent=1 // pred_fallthru
      _
    // Predicated region
    $region26: #{dnn_forward.1} parent=1 // pred_check
      _
    $region27: #{dnn_forward.1} parent=1 // pred_check_branch
      %86 = sbr.rel (0) target = $region29
    $region28: #{dnn_forward.1} parent=1 // pred_region
      %s88 = ssub.s32 16, 16
      %89 = vsyncadd [#allocation12], %s88
      %s91 = sshll.u32 [#allocation13], 4
      %s92 = int_to_ptr.vmem [resolvable:$true] %s91
      %94 = dma.hbm_to_vmem [thread:$0]  %s6, 16, %s92, [#allocation12]
    $region29: #{dnn_forward.1} parent=1 // pred_fallthru
      _
    // Predicated region
    $region30: #{dnn_forward.1} parent=1 // pred_check
      _
    $region31: #{dnn_forward.1} parent=1 // pred_check_branch
      %96 = sbr.rel (0) target = $region33
    $region32: #{dnn_forward.1} parent=1 // pred_region
      %97 = dma.done [#allocation3], 256
    $region33: #{dnn_forward.1} parent=1 // pred_fallthru
      _
    // Predicated region
    $region34: #{dnn_forward.1} parent=1 // pred_check
      _
    $region35: #{dnn_forward.1} parent=1 // pred_check_branch
      %99 = sbr.rel (0) target = $region37
    $region36: #{dnn_forward.1} parent=1 // pred_region
      %100 = dma.done [#allocation6], 256
    $region37: #{dnn_forward.1} parent=1 // pred_fallthru
      _
    // Predicated region
    $region38: #{dnn_forward.1} parent=1 // pred_check
      _
    $region39: #{dnn_forward.1} parent=1 // pred_check_branch
      %102 = sbr.rel (0) target = $region41
    $region40: #{dnn_forward.1} parent=1 // pred_region
      %103 = dma.done [#allocation6], 16
    $region41: #{dnn_forward.1} parent=1 // pred_fallthru
      _
    // Predicated region
    $region42: #{dnn_forward.1} parent=1 // pred_check
      _
    $region43: #{dnn_forward.1} parent=1 // pred_check_branch
      %105 = sbr.rel (0) target = $region45
    $region44: #{dnn_forward.1} parent=1 // pred_region
      %106 = dma.done [#allocation9], 512
    $region45: #{dnn_forward.1} parent=1 // pred_fallthru
      _
    // Predicated region
    $region46: #{dnn_forward.1} parent=1 // pred_check
      _
    $region47: #{dnn_forward.1} parent=1 // pred_check_branch
      %108 = sbr.rel (0) target = $region49
    $region48: #{dnn_forward.1} parent=1 // pred_region
      %109 = dma.done [#allocation9], 16
    $region49: #{dnn_forward.1} parent=1 // pred_fallthru
      _
    // Predicated region
    $region50: #{dnn_forward.1} parent=1 // pred_check
      _
    $region51: #{dnn_forward.1} parent=1 // pred_check_branch
      %111 = sbr.rel (0) target = $region53
    $region52: #{dnn_forward.1} parent=1 // pred_region
      %112 = dma.done [#allocation12], 512
    $region53: #{dnn_forward.1} parent=1 // pred_fallthru
      _
    // Predicated region
    $region54: #{dnn_forward.1} parent=1 // pred_check
      _
    $region55: #{dnn_forward.1} parent=1 // pred_check_branch
      %114 = sbr.rel (0) target = $region57
    $region56: #{dnn_forward.1} parent=1 // pred_region
      %115 = dma.done [#allocation12], 16
    $region57: #{dnn_forward.1} parent=1 // pred_fallthru
      _
    %v116 = vld [vmem:[#allocation2] sm:$0xff]
    %v117 = vld [vmem:[#allocation2 + $0x8] sm:$0xff]
    %v118 = vld [vmem:[#allocation5] sm:$0xff]
    %v119 = vld [vmem:[#allocation5 + $0x8] sm:$0xff]
    %v120 = vld [vmem:[#allocation7] sm:$0x1]
    %v122 = vlaneseq
    %v123 = vshrl.u32 %v122, 7
    %v124 = vsub.s32 0, %v123
    %v125 = vrot.slane %v120, %v124
    %vm127 = vcmask 130048
    %v129 = vsel %vm127, %v116, 0
    %v132 = vsel %vm127, %v117, 0
    %134 = vmatprep.subr.mxu0 0.0
    %135 = vmatpush1.msra.mxu0 %v118
    %136 = vmatprep.subr.mxu0 0.0
    %137 = vmatpush1.msra.mxu0 %v119
    %138 = vmatprep.subr.mxu0 0.0
    %139 = vmatpush1.msra.mxu0 0.0
    %140 = vmatprep.subr.mxu0 0.0
    %141 = vmatpush1.msra.mxu0 0.0
    %142 = vmatprep.subr.mxu0 0.0
    %143 = vmatpush1.msra.mxu0 0.0
    %144 = vmatprep.subr.mxu0 0.0
    %145 = vmatpush1.msra.mxu0 0.0
    %146 = vmatprep.subr.mxu0 0.0
    %147 = vmatpush1.msra.mxu0 0.0
    %148 = vmatprep.subr.mxu0 0.0
    %149 = vmatpush1.msra.mxu0 0.0
    %150 = vmatprep.subr.mxu0 0.0
    %151 = vmatpush1.msra.mxu0 0.0
    %152 = vmatprep.subr.mxu0 0.0
    %153 = vmatpush1.msra.mxu0 0.0
    %154 = vmatprep.subr.mxu0 0.0
    %155 = vmatpush1.msra.mxu0 0.0
    %156 = vmatprep.subr.mxu0 0.0
    %157 = vmatpush1.msra.mxu0 0.0
    %158 = vmatprep.subr.mxu0 0.0
    %159 = vmatpush1.msra.mxu0 0.0
    %160 = vmatprep.subr.mxu0 0.0
    %161 = vmatpush1.msra.mxu0 0.0
    %162 = vmatprep.subr.mxu0 0.0
    %163 = vmatpush1.msra.mxu0 0.0
    %164 = vmatprep.subr.mxu0 0.0
    %165 = vmatpush1.msra.mxu0 0.0
    %166 = vmatprep.subr.mxu0 0.0
    %167 = vmatpush1.msra.mxu0 0.0
    %168 = vmatprep.subr.mxu0 0.0
    %169 = vmatpush1.msra.mxu0 0.0
    %170 = vmatprep.subr.mxu0 0.0
    %171 = vmatpush1.msra.mxu0 0.0
    %172 = vmatprep.subr.mxu0 0.0
    %173 = vmatpush1.msra.mxu0 0.0
    %174 = vmatprep.subr.mxu0 0.0
    %175 = vmatpush1.msra.mxu0 0.0
    %176 = vmatprep.subr.mxu0 0.0
    %177 = vmatpush1.msra.mxu0 0.0
    %178 = vmatprep.subr.mxu0 0.0
    %179 = vmatpush1.msra.mxu0 0.0
    %180 = vmatprep.subr.mxu0 0.0
    %181 = vmatpush1.msra.mxu0 0.0
    %182 = vmatprep.subr.mxu0 0.0
    %183 = vmatpush1.msra.mxu0 0.0
    %184 = vmatprep.subr.mxu0 0.0
    %185 = vmatpush1.msra.mxu0 0.0
    %186 = vmatprep.subr.mxu0 0.0
    %187 = vmatpush1.msra.mxu0 0.0
    %188 = vmatprep.subr.mxu0 0.0
    %189 = vmatpush1.msra.mxu0 0.0
    %190 = vmatprep.subr.mxu0 0.0
    %191 = vmatpush1.msra.mxu0 0.0
    %192 = vmatprep.subr.mxu0 0.0
    %193 = vmatpush1.msra.mxu0 0.0
    %194 = vmatprep.subr.mxu0 0.0
    %195 = vmatpush1.msra.mxu0 0.0
    %196 = vmatprep.subr.mxu0 0.0
    %197 = vmatpush1.msra.mxu0 0.0
    %198 = vmatprep.mubr.f32.mxu0 0.0
    %199 = vmatmul.mubr.f32.gmra.mrb[0].mxu0 %v129
    %v200 = vpop.f32.mrb[0].mxu0
    %v201 = vadd.f32 %v125, %v200
    %v202 = vpop.f32.mrb[0].mxu0
    %203 = vmatprep.mubr.f32.mxu0 0.0
    %204 = vmatmul.mubr.f32.gmra.mrb[0].mxu0 %v132
    %v205 = vpop.f32.mrb[0].mxu0
    %v206 = vadd.f32 %v125, %v205
    %v207 = vpop.f32.mrb[0].mxu0
    %208 = vdwg.mxu0
    %v209 = vmax.f32 %v201, 0.0
    %v210 = vmax.f32 %v206, 0.0
    %v211 = vld [vmem:[#allocation8] sm:$0xff]
    %v212 = vld [vmem:[#allocation8 + $0x8] sm:$0xff]
    %v213 = vld [vmem:[#allocation8 + $0x10] sm:$0xff]
    %v214 = vld [vmem:[#allocation8 + $0x18] sm:$0xff]
    %v215 = vld [vmem:[#allocation10] sm:$0x1]
    %v217 = vlaneseq
    %v218 = vshrl.u32 %v217, 7
    %v219 = vsub.s32 0, %v218
    %v220 = vrot.slane %v215, %v219
    %vm222 = vcmask 261120
    %v224 = vsel %vm222, %v209, 0
    %v227 = vsel %vm222, %v210, 0
    %229 = vmatprep.subr.mxu0 0.0
    %230 = vmatpush1.msra.mxu0 %v211
    %231 = vmatprep.subr.mxu0 0.0
    %232 = vmatpush1.msra.mxu0 %v212
    %233 = vmatprep.subr.mxu0 0.0
    %234 = vmatpush1.msra.mxu0 %v213
    %235 = vmatprep.subr.mxu0 0.0
    %236 = vmatpush1.msra.mxu0 %v214
    %237 = vmatprep.subr.mxu0 0.0
    %238 = vmatpush1.msra.mxu0 0.0
    %239 = vmatprep.subr.mxu0 0.0
    %240 = vmatpush1.msra.mxu0 0.0
    %241 = vmatprep.subr.mxu0 0.0
    %242 = vmatpush1.msra.mxu0 0.0
    %243 = vmatprep.subr.mxu0 0.0
    %244 = vmatpush1.msra.mxu0 0.0
    %245 = vmatprep.subr.mxu0 0.0
    %246 = vmatpush1.msra.mxu0 0.0
    %247 = vmatprep.subr.mxu0 0.0
    %248 = vmatpush1.msra.mxu0 0.0
    %249 = vmatprep.subr.mxu0 0.0
    %250 = vmatpush1.msra.mxu0 0.0
    %251 = vmatprep.subr.mxu0 0.0
    %252 = vmatpush1.msra.mxu0 0.0
    %253 = vmatprep.subr.mxu0 0.0
    %254 = vmatpush1.msra.mxu0 0.0
    %255 = vmatprep.subr.mxu0 0.0
    %256 = vmatpush1.msra.mxu0 0.0
    %257 = vmatprep.subr.mxu0 0.0
    %258 = vmatpush1.msra.mxu0 0.0
    %259 = vmatprep.subr.mxu0 0.0
    %260 = vmatpush1.msra.mxu0 0.0
    %261 = vmatprep.subr.mxu0 0.0
    %262 = vmatpush1.msra.mxu0 0.0
    %263 = vmatprep.subr.mxu0 0.0
    %264 = vmatpush1.msra.mxu0 0.0
    %265 = vmatprep.subr.mxu0 0.0
    %266 = vmatpush1.msra.mxu0 0.0
    %267 = vmatprep.subr.mxu0 0.0
    %268 = vmatpush1.msra.mxu0 0.0
    %269 = vmatprep.subr.mxu0 0.0
    %270 = vmatpush1.msra.mxu0 0.0
    %271 = vmatprep.subr.mxu0 0.0
    %272 = vmatpush1.msra.mxu0 0.0
    %273 = vmatprep.subr.mxu0 0.0
    %274 = vmatpush1.msra.mxu0 0.0
    %275 = vmatprep.subr.mxu0 0.0
    %276 = vmatpush1.msra.mxu0 0.0
    %277 = vmatprep.subr.mxu0 0.0
    %278 = vmatpush1.msra.mxu0 0.0
    %279 = vmatprep.subr.mxu0 0.0
    %280 = vmatpush1.msra.mxu0 0.0
    %281 = vmatprep.subr.mxu0 0.0
    %282 = vmatpush1.msra.mxu0 0.0
    %283 = vmatprep.subr.mxu0 0.0
    %284 = vmatpush1.msra.mxu0 0.0
    %285 = vmatprep.subr.mxu0 0.0
    %286 = vmatpush1.msra.mxu0 0.0
    %287 = vmatprep.subr.mxu0 0.0
    %288 = vmatpush1.msra.mxu0 0.0
    %289 = vmatprep.subr.mxu0 0.0
    %290 = vmatpush1.msra.mxu0 0.0
    %291 = vmatprep.subr.mxu0 0.0
    %292 = vmatpush1.msra.mxu0 0.0
    %293 = vmatprep.mubr.f32.mxu0 0.0
    %294 = vmatmul.mubr.f32.gmra.mrb[0].mxu0 %v224
    %v295 = vpop.f32.mrb[0].mxu0
    %v296 = vadd.f32 %v220, %v295
    %v297 = vpop.f32.mrb[0].mxu0
    %298 = vmatprep.mubr.f32.mxu0 0.0
    %299 = vmatmul.mubr.f32.gmra.mrb[0].mxu0 %v227
    %v300 = vpop.f32.mrb[0].mxu0
    %v301 = vadd.f32 %v220, %v300
    %v302 = vpop.f32.mrb[0].mxu0
    %303 = vdwg.mxu0
    %v304 = vmax.f32 %v296, 0.0
    %v305 = vmax.f32 %v301, 0.0
    %v306 = vld [vmem:[#allocation11] sm:$0xff]
    %v307 = vld [vmem:[#allocation11 + $0x8] sm:$0xff]
    %v308 = vld [vmem:[#allocation11 + $0x10] sm:$0xff]
    %v309 = vld [vmem:[#allocation11 + $0x18] sm:$0xff]
    %v310 = vld [vmem:[#allocation13] sm:$0x1]
    %v312 = vlaneseq
    %v313 = vshrl.u32 %v312, 7
    %v314 = vsub.s32 0, %v313
    %v315 = vrot.slane %v310, %v314
    %v318 = vsel %vm222, %v304, 0
    %v321 = vsel %vm222, %v305, 0
    %323 = vmatprep.subr.mxu0 0.0
    %324 = vmatpush1.msra.mxu0 %v306
    %325 = vmatprep.subr.mxu0 0.0
    %326 = vmatpush1.msra.mxu0 %v307
    %327 = vmatprep.subr.mxu0 0.0
    %328 = vmatpush1.msra.mxu0 %v308
    %329 = vmatprep.subr.mxu0 0.0
    %330 = vmatpush1.msra.mxu0 %v309
    %331 = vmatprep.subr.mxu0 0.0
    %332 = vmatpush1.msra.mxu0 0.0
    %333 = vmatprep.subr.mxu0 0.0
    %334 = vmatpush1.msra.mxu0 0.0
    %335 = vmatprep.subr.mxu0 0.0
    %336 = vmatpush1.msra.mxu0 0.0
    %337 = vmatprep.subr.mxu0 0.0
    %338 = vmatpush1.msra.mxu0 0.0
    %339 = vmatprep.subr.mxu0 0.0
    %340 = vmatpush1.msra.mxu0 0.0
    %341 = vmatprep.subr.mxu0 0.0
    %342 = vmatpush1.msra.mxu0 0.0
    %343 = vmatprep.subr.mxu0 0.0
    %344 = vmatpush1.msra.mxu0 0.0
    %345 = vmatprep.subr.mxu0 0.0
    %346 = vmatpush1.msra.mxu0 0.0
    %347 = vmatprep.subr.mxu0 0.0
    %348 = vmatpush1.msra.mxu0 0.0
    %349 = vmatprep.subr.mxu0 0.0
    %350 = vmatpush1.msra.mxu0 0.0
    %351 = vmatprep.subr.mxu0 0.0
    %352 = vmatpush1.msra.mxu0 0.0
    %353 = vmatprep.subr.mxu0 0.0
    %354 = vmatpush1.msra.mxu0 0.0
    %355 = vmatprep.subr.mxu0 0.0
    %356 = vmatpush1.msra.mxu0 0.0
    %357 = vmatprep.subr.mxu0 0.0
    %358 = vmatpush1.msra.mxu0 0.0
    %359 = vmatprep.subr.mxu0 0.0
    %360 = vmatpush1.msra.mxu0 0.0
    %361 = vmatprep.subr.mxu0 0.0
    %362 = vmatpush1.msra.mxu0 0.0
    %363 = vmatprep.subr.mxu0 0.0
    %364 = vmatpush1.msra.mxu0 0.0
    %365 = vmatprep.subr.mxu0 0.0
    %366 = vmatpush1.msra.mxu0 0.0
    %367 = vmatprep.subr.mxu0 0.0
    %368 = vmatpush1.msra.mxu0 0.0
    %369 = vmatprep.subr.mxu0 0.0
    %370 = vmatpush1.msra.mxu0 0.0
    %371 = vmatprep.subr.mxu0 0.0
    %372 = vmatpush1.msra.mxu0 0.0
    %373 = vmatprep.subr.mxu0 0.0
    %374 = vmatpush1.msra.mxu0 0.0
    %375 = vmatprep.subr.mxu0 0.0
    %376 = vmatpush1.msra.mxu0 0.0
    %377 = vmatprep.subr.mxu0 0.0
    %378 = vmatpush1.msra.mxu0 0.0
    %379 = vmatprep.subr.mxu0 0.0
    %380 = vmatpush1.msra.mxu0 0.0
    %381 = vmatprep.subr.mxu0 0.0
    %382 = vmatpush1.msra.mxu0 0.0
    %383 = vmatprep.subr.mxu0 0.0
    %384 = vmatpush1.msra.mxu0 0.0
    %385 = vmatprep.subr.mxu0 0.0
    %386 = vmatpush1.msra.mxu0 0.0
    %387 = vmatprep.mubr.f32.mxu0 0.0
    %388 = vmatmul.mubr.f32.gmra.mrb[0].mxu0 %v318
    %v389 = vpop.f32.mrb[0].mxu0
    %v390 = vadd.f32 %v315, %v389
    %v391 = vpop.f32.mrb[0].mxu0
    %392 = vmatprep.mubr.f32.mxu0 0.0
    %393 = vmatmul.mubr.f32.gmra.mrb[0].mxu0 %v321
    %v394 = vpop.f32.mrb[0].mxu0
    %v395 = vadd.f32 %v315, %v394
    %v396 = vpop.f32.mrb[0].mxu0
    %397 = vdwg.mxu0
    %398 = vst [vmem:[#allocation14] sm:$0xff] %v390
    %399 = vst [vmem:[#allocation14 + $0x8] sm:$0xff] %v395
    // Predicated region
    $region58: #{dnn_forward.1} parent=1 // pred_check
      _
    $region59: #{dnn_forward.1} parent=1 // pred_check_branch
      %401 = sbr.rel (0) target = $region61
    $region60: #{dnn_forward.1} parent=1 // pred_region
      %s403 = ssub.s32 256, 256
      %404 = vsyncadd [#allocation4], %s403
      %s405 = sshll.u32 [#allocation14], 4
      %s406 = int_to_ptr.vmem [resolvable:$true] %s405
      %411 = dma.vmem_to_hbm [thread:$0]  %s406, 256, %s7, [#allocation4], 128, 128, 8
    $region61: #{dnn_forward.1} parent=1 // pred_fallthru
      _
    // Predicated region
    $region62: #{dnn_forward.1} parent=1 // pred_check
      _
    $region63: #{dnn_forward.1} parent=1 // pred_check_branch
      %413 = sbr.rel (0) target = $region65
    $region64: #{dnn_forward.1} parent=1 // pred_region
      %414 = dma.done [#allocation4], 256
    $region65: #{dnn_forward.1} parent=1 // pred_fallthru
      _
    %415 = vsyncpa [#allocation3], 1
    %416 = vsyncpa [#allocation6], 1
    %417 = vsyncpa [#allocation9], 1
    %418 = vsyncpa [#allocation12], 1
    %419 = vsyncpa [#allocation4], 1

</llo_original>
